<compile_context>
chip_gen: v7x
topology: tpu7x:2x2x1
jax: 0.10.0
libtpu: 0.0.40
codegen_flags: <defaults>
</compile_context>

<pallas_src>
import functools

import jax
import jax.numpy as jnp
from jax.experimental import pallas as pl
from jax.experimental.pallas import tpu as pltpu


# Per grid step the BlockSpec pipeline holds ~2x input + ~2x output buffers
# plus a block-sized temporary or two (x*x before the reduce) -> ~6 blocks.
_PIPELINE_BLOCKS = 6


def _vmem_budgets(itemsize):
    """(vmem_limit_bytes, raw_block_budget_bytes), generation aware."""
    try:
        cap = int(pltpu.get_tpu_info().vmem_capacity_bytes)
    except Exception:  # pragma: no cover - CPU interpret / older runtimes
        cap = 64 << 20  # conservative fallback
    if cap <= (64 << 20):  # v7x-class: 64 MiB per TensorCore
        vmem_limit = 48 << 20
        block_budget = (4 << 20) if itemsize <= 2 else (6 << 20)
    else:                  # v5e / v6e: 128 MiB (v5e default scoped VMEM is only
                           # 16 MiB, so the explicit limit below is required)
        vmem_limit = 96 << 20
        block_budget = (12 << 20) if itemsize <= 2 else (14 << 20)
    return vmem_limit, block_budget


def _sublane_multiple(itemsize):
    return {4: 8, 2: 16, 1: 32}.get(itemsize, 8)


def _pad_to(v, m):
    return ((v + m - 1) // m) * m


def _pick_batch_block(n, sample_bytes, block_budget_bytes, vmem_limit_bytes):
    """Largest batch block (divisor of n) whose *pipeline* footprint fits.

    Prefers grids with >= min(4, n) steps and an even step count (keeps both
    v7x TensorCores loaded and the DMA pipeline overlapped).  Returns None if
    even a single sample is over budget (caller uses the HW-tiled path).
    """
    per_block_cap = min(block_budget_bytes, vmem_limit_bytes // _PIPELINE_BLOCKS)
    cands = [nb for nb in range(1, n + 1)
             if n % nb == 0 and nb * sample_bytes <= per_block_cap]
    if not cands:
        return None
    target_steps = min(4, n)

    def score(nb):
        steps = n // nb
        return (steps >= target_steps, steps % 2 == 0 or steps == 1, nb)

    return max(cands, key=score)


def _gate_from_stats(s1, s2, w1t, b1, w2, b2, inv_hw):
    """Per-channel attention gate from fp32 sum / sum-of-squares."""
    mean = s1 * inv_hw                                      # (Nb, Cp, 1)
    var = jnp.maximum(s2 * inv_hw - mean * mean, 0.0)       # clamp cancellation
    y = jnp.sqrt(var) + mean                                 # contrast + avg pool
    # FC1 (C -> Cr): contract over C (sublane axis) -> pure VPU reduce.
    z = jnp.sum(y * w1t, axis=1, keepdims=True) + b1         # (Nb, 1, Cr)
    z = jnp.maximum(z, 0.0)                                   # ReLU
    # FC2 (Cr -> C): contract over Cr (lane axis) -> pure VPU reduce.
    a = jnp.sum(z * w2, axis=2, keepdims=True) + b2           # (Nb, Cp, 1)
    # Exact sigmoid: the gate is only (Nb, C) elements, approximation saves
    # nothing measurable in this HBM-bound kernel.
    return 1.0 / (1.0 + jnp.exp(-a))


def _cca_fused_kernel(x_ref, w1t_ref, b1_ref, w2_ref, b2_ref, o_ref, *, inv_hw):
    """Single-pass fused kernel: whole (nb, Cp, HWp) block resident in VMEM."""
    x = x_ref[...]                                            # native dtype
    # fp32 accumulation without materializing a full fp32 copy of the block.
    s1 = jnp.sum(x, axis=2, keepdims=True, dtype=jnp.float32)       # (Nb, Cp, 1)
    s2 = jnp.sum(x * x, axis=2, keepdims=True, dtype=jnp.float32)   # (Nb, Cp, 1)
    a = _gate_from_stats(s1, s2, w1t_ref[...], b1_ref[...],
                         w2_ref[...], b2_ref[...], inv_hw)
    o_ref[...] = x * a.astype(x.dtype)                        # lane broadcast over HW


def _cca_stats_kernel(x_ref, w1t_ref, b1_ref, w2_ref, b2_ref, a_ref,
                      s1_ref, s2_ref, *, inv_hw):
    """HW-tiled reduction: accumulate s1/s2, finalize gate on the last HW step."""
    h = pl.program_id(1)

    @pl.when(h == 0)
    def _():
        s1_ref[...] = jnp.zeros_like(s1_ref)
        s2_ref[...] = jnp.zeros_like(s2_ref)

    x = x_ref[...]                                            # (1, Cp, thw)
    s1_ref[...] += jnp.sum(x, axis=2, keepdims=True, dtype=jnp.float32)
    s2_ref[...] += jnp.sum(x * x, axis=2, keepdims=True, dtype=jnp.float32)

    @pl.when(h == pl.num_programs(1) - 1)
    def _():
        a_ref[...] = _gate_from_stats(s1_ref[...], s2_ref[...], w1t_ref[...],
                                      b1_ref[...], w2_ref[...], b2_ref[...],
                                      inv_hw)


def _cca_scale_kernel(x_ref, a_ref, o_ref):
    x = x_ref[...]
    o_ref[...] = x * a_ref[...].astype(x.dtype)


def cca_layer(x, w1, b1, w2, b2, *, donate_input=False, block_budget_bytes=None):
    """CCALayer forward.

    x: (N, C, H, W); w1: (Cr, C); b1: (Cr,); w2: (C, Cr); b2: (C,)
    (1x1 conv weights of conv_du flattened to dense matrices).
    Set donate_input=True only if the caller does not reuse x afterwards.
    """
    N, C, H, W = x.shape
    HW = H * W
    Cr = w1.shape[0]
    itemsize = x.dtype.itemsize

    vmem_limit, auto_budget = _vmem_budgets(itemsize)
    block_budget = block_budget_bytes if block_budget_bytes is not None else auto_budget

    # Lane/sublane-dense padding.  Zero padding keeps the statistics exact:
    # zeros add nothing to sum / sum-of-squares and we normalize by true HW.
    HWp = _pad_to(HW, 128)
    Cp = _pad_to(C, _sublane_multiple(itemsize))
    xr = x.reshape(N, C, HW)
    needs_pad = (HWp != HW) or (Cp != C)
    if needs_pad:
        xr = jnp.pad(xr, ((0, 0), (0, Cp - C), (0, HWp - HW)))

    # Parameter layouts: FC1 contracts over C (sublane reduce), FC2 over Cr
    # (lane reduce) -> no lane<->sublane relayout inside the kernel.
    f32 = jnp.float32
    w1t = jnp.transpose(w1).astype(f32)                       # (C, Cr)
    w2r = w2.astype(f32)                                      # (C, Cr)
    b2r = b2.astype(f32)                                      # (C,)
    if Cp != C:
        w1t = jnp.pad(w1t, ((0, Cp - C), (0, 0)))
        w2r = jnp.pad(w2r, ((0, Cp - C), (0, 0)))
        b2r = jnp.pad(b2r, ((0, Cp - C),))
    w1t = w1t.reshape(1, Cp, Cr)
    b1r = b1.astype(f32).reshape(1, 1, Cr)
    w2r = w2r.reshape(1, Cp, Cr)
    b2r = b2r.reshape(1, Cp, 1)

    inv_hw = 1.0 / float(HW)
    sample_bytes = Cp * HWp * itemsize
    nb = _pick_batch_block(N, sample_bytes, block_budget, vmem_limit)
    aliases = {0: 0} if donate_input else {}

    if nb is not None:
        # -------- fused single-pass path --------
        grid = (N // nb,)
        kern = functools.partial(_cca_fused_kernel, inv_hw=inv_hw)
        out = pl.pallas_call(
            kern,
            out_shape=jax.ShapeDtypeStruct((N, Cp, HWp), x.dtype),
            grid_spec=pltpu.PrefetchScalarGridSpec(
                num_scalar_prefetch=0,
                grid=grid,
                in_specs=[
                    pl.BlockSpec((nb, Cp, HWp), lambda i: (i, 0, 0)),
                    pl.BlockSpec((1, Cp, Cr), lambda i: (0, 0, 0)),
                    pl.BlockSpec((1, 1, Cr), lambda i: (0, 0, 0)),
                    pl.BlockSpec((1, Cp, Cr), lambda i: (0, 0, 0)),
                    pl.BlockSpec((1, Cp, 1), lambda i: (0, 0, 0)),
                ],
                out_specs=pl.BlockSpec((nb, Cp, HWp), lambda i: (i, 0, 0)),
            ),
            compiler_params=pltpu.CompilerParams(
                dimension_semantics=("parallel",),
                vmem_limit_bytes=vmem_limit,
            ),
            cost_estimate=pl.CostEstimate(
                flops=int(5 * N * C * HW),
                transcendentals=int(N * C),
                bytes_accessed=int(2 * N * Cp * HWp * itemsize),
            ),
            input_output_aliases=aliases,
        )(xr, w1t, b1r, w2r, b2r)
    else:
        # -------- HW-tiled two-pass path (large feature maps, e.g. v7x) --------
        per_block_cap = min(block_budget, vmem_limit // _PIPELINE_BLOCKS)
        max_mult = max(1, per_block_cap // (Cp * 128 * itemsize))
        thw = 128
        for mult in range(max_mult, 0, -1):
            if (HWp // 128) % mult == 0:
                thw = 128 * mult
                break
        hw_steps = HWp // thw

        # Pass 1: HW-tiled reduction -> per-(sample, channel) gate.
        stats_kern = functools.partial(_cca_stats_kernel, inv_hw=inv_hw)
        gate = pl.pallas_call(
            stats_kern,
            out_shape=jax.ShapeDtypeStruct((N, Cp, 1), jnp.float32),
            grid_spec=pltpu.PrefetchScalarGridSpec(
                num_scalar_prefetch=0,
                grid=(N, hw_steps),
                in_specs=[
                    pl.BlockSpec((1, Cp, thw), lambda i, h: (i, 0, h)),
                    pl.BlockSpec((1, Cp, Cr), lambda i, h: (0, 0, 0)),
                    pl.BlockSpec((1, 1, Cr), lambda i, h: (0, 0, 0)),
                    pl.BlockSpec((1, Cp, Cr), lambda i, h: (0, 0, 0)),
                    pl.BlockSpec((1, Cp, 1), lambda i, h: (0, 0, 0)),
                ],
                out_specs=pl.BlockSpec((1, Cp, 1), lambda i, h: (i, 0, 0)),
                scratch_shapes=[pltpu.VMEM((1, Cp, 1), jnp.float32),
                                pltpu.VMEM((1, Cp, 1), jnp.float32)],
            ),
            compiler_params=pltpu.CompilerParams(
                dimension_semantics=("parallel", "arbitrary"),
                vmem_limit_bytes=vmem_limit,
            ),
            cost_estimate=pl.CostEstimate(
                flops=int(3 * N * C * HW),
                transcendentals=int(N * C),
                bytes_accessed=int(N * Cp * HWp * itemsize),
            ),
        )(xr, w1t, b1r, w2r, b2r)

        # Pass 2: lane-dense scale sweep over HW.
        out = pl.pallas_call(
            _cca_scale_kernel,
            out_shape=jax.ShapeDtypeStruct((N, Cp, HWp), x.dtype),
            grid_spec=pltpu.PrefetchScalarGridSpec(
                num_scalar_prefetch=0,
                grid=(N, hw_steps),
                in_specs=[
                    pl.BlockSpec((1, Cp, thw), lambda i, h: (i, 0, h)),
                    pl.BlockSpec((1, Cp, 1), lambda i, h: (i, 0, 0)),
                ],
                out_specs=pl.BlockSpec((1, Cp, thw), lambda i, h: (i, 0, h)),
            ),
            compiler_params=pltpu.CompilerParams(
                dimension_semantics=("parallel", "parallel"),
                vmem_limit_bytes=vmem_limit,
            ),
            cost_estimate=pl.CostEstimate(
                flops=int(N * C * HW),
                transcendentals=0,
                bytes_accessed=int(2 * N * Cp * HWp * itemsize),
            ),
            input_output_aliases=aliases,
        )(xr, gate)

    if needs_pad:
        out = out[:, :C, :HW]
    return out.reshape(N, C, H, W)


def cca_reference(x, w1, b1, w2, b2):
    """Pure-JAX reference mirroring the PyTorch forward (two-pass std)."""
    hw = x.shape[2] * x.shape[3]
    mean = jnp.sum(x, axis=(2, 3), keepdims=True) / hw
    var = jnp.sum((x - mean) ** 2, axis=(2, 3), keepdims=True) / hw
    y = jnp.sqrt(var) + mean                                  # (N, C, 1, 1)
    yv = y[:, :, 0, 0]                                        # (N, C)
    z = jnp.maximum(yv @ w1.T + b1, 0.0)                      # (N, Cr)
    a = jax.nn.sigmoid(z @ w2.T + b2)                         # (N, C)
    return x * a[:, :, None, None]


if __name__ == "__main__":
    key = jax.random.PRNGKey(0)
    kx, k1, k2, k3, k4, kx2 = jax.random.split(key, 6)

    # ---- Test 1: fused single-pass path (HW already lane-dense) ----
    N, C, H, W = 2, 32, 16, 16
    reduction = 16
    Cr = C // reduction

    x = jax.random.normal(kx, (N, C, H, W), dtype=jnp.float32)
    # 1x1 conv weights (Conv2d(C, Cr, 1) and Conv2d(Cr, C, 1)) as dense matrices.
    w1 = jax.random.normal(k1, (Cr, C), dtype=jnp.float32) * 0.1
    b1 = jax.random.normal(k2, (Cr,), dtype=jnp.float32) * 0.1
    w2 = jax.random.normal(k3, (C, Cr), dtype=jnp.float32) * 0.1
    b2 = jax.random.normal(k4, (C,), dtype=jnp.float32) * 0.1

    out = jax.block_until_ready(cca_layer(x, w1, b1, w2, b2))
    ref = cca_reference(x, w1, b1, w2, b2)
    assert out.shape == (N, C, H, W)
    assert jnp.allclose(out, ref, atol=1e-4, rtol=1e-4), "fused path mismatch"

    # ---- Test 2: HW-tiled two-pass path + lane padding (HW=169 -> 256),
    # forced by an artificially tiny block budget to exercise the fallback ----
    N2, H2, W2 = 3, 13, 13
    x2 = jax.random.normal(kx2, (N2, C, H2, W2), dtype=jnp.float32)
    out2 = jax.block_until_ready(
        cca_layer(x2, w1, b1, w2, b2, block_budget_bytes=16 << 10))
    ref2 = cca_reference(x2, w1, b1, w2, b2)
    assert out2.shape == (N2, C, H2, W2)
    assert jnp.allclose(out2, ref2, atol=1e-4, rtol=1e-4), "tiled path mismatch"

    print("KERNEL_OK")
</pallas_src>

<mosaic_0001>
module attributes {stable_mosaic.version = 11 : i64} {
  func.func @_cca_fused_kernel(%arg0: i32, %arg1: memref<1x32x256xf32, #tpu.memory_space<vmem>>, %arg2: memref<1x32x2xf32, #tpu.memory_space<vmem>>, %arg3: memref<1x1x2xf32, #tpu.memory_space<vmem>>, %arg4: memref<1x32x2xf32, #tpu.memory_space<vmem>>, %arg5: memref<1x32x1xf32, #tpu.memory_space<vmem>>, %arg6: memref<1x32x256xf32, #tpu.memory_space<vmem>>) attributes {dimension_semantics = [#tpu.dimension_semantics<parallel>], iteration_bounds = array<i64: 2>, scalar_prefetch = 0 : i64, scratch_operands = 0 : i64, tpu.core_type = #tpu.core_type<tc>, window_params = [{transform_indices = @transform_0, window_bounds = array<i64: 1, 32, 256>}, {pipeline_mode = #tpu.pipeline_mode<synchronous>, transform_indices = @transform_1, window_bounds = array<i64: 1, 32, 2>}, {pipeline_mode = #tpu.pipeline_mode<synchronous>, transform_indices = @transform_2, window_bounds = array<i64: 1, 1, 2>}, {pipeline_mode = #tpu.pipeline_mode<synchronous>, transform_indices = @transform_3, window_bounds = array<i64: 1, 32, 2>}, {pipeline_mode = #tpu.pipeline_mode<synchronous>, transform_indices = @transform_4, window_bounds = array<i64: 1, 32, 1>}, {transform_indices = @transform_5, window_bounds = array<i64: 1, 32, 256>}]} {
    %c0 = arith.constant 0 : index
    %c0_0 = arith.constant 0 : index
    %c0_1 = arith.constant 0 : index
    %0 = vector.load %arg1[%c0, %c0_0, %c0_1] : memref<1x32x256xf32, #tpu.memory_space<vmem>>, vector<1x32x256xf32>
    %cst = arith.constant dense<0.000000e+00> : vector<1x32xf32>
    %1 = vector.multi_reduction <add>, %0, %cst [2] : vector<1x32x256xf32> to vector<1x32xf32>
    %2 = vector.shape_cast %1 : vector<1x32xf32> to vector<1x32x1xf32>
    %3 = arith.mulf %0, %0 : vector<1x32x256xf32>
    %cst_2 = arith.constant dense<0.000000e+00> : vector<1x32xf32>
    %4 = vector.multi_reduction <add>, %3, %cst_2 [2] : vector<1x32x256xf32> to vector<1x32xf32>
    %5 = vector.shape_cast %4 : vector<1x32xf32> to vector<1x32x1xf32>
    %c0_3 = arith.constant 0 : index
    %c0_4 = arith.constant 0 : index
    %c0_5 = arith.constant 0 : index
    %6 = vector.load %arg2[%c0_3, %c0_4, %c0_5] : memref<1x32x2xf32, #tpu.memory_space<vmem>>, vector<1x32x2xf32>
    %c0_6 = arith.constant 0 : index
    %c0_7 = arith.constant 0 : index
    %c0_8 = arith.constant 0 : index
    %7 = vector.load %arg3[%c0_6, %c0_7, %c0_8] : memref<1x1x2xf32, #tpu.memory_space<vmem>>, vector<1x1x2xf32>
    %c0_9 = arith.constant 0 : index
    %c0_10 = arith.constant 0 : index
    %c0_11 = arith.constant 0 : index
    %8 = vector.load %arg4[%c0_9, %c0_10, %c0_11] : memref<1x32x2xf32, #tpu.memory_space<vmem>>, vector<1x32x2xf32>
    %c0_12 = arith.constant 0 : index
    %c0_13 = arith.constant 0 : index
    %c0_14 = arith.constant 0 : index
    %9 = vector.load %arg5[%c0_12, %c0_13, %c0_14] : memref<1x32x1xf32, #tpu.memory_space<vmem>>, vector<1x32x1xf32>
    %cst_15 = arith.constant 3.906250e-03 : f32
    %10 = vector.broadcast %cst_15 : f32 to vector<1x32x1xf32>
    %11 = arith.mulf %2, %10 : vector<1x32x1xf32>
    %cst_16 = arith.constant 3.906250e-03 : f32
    %12 = vector.broadcast %cst_16 : f32 to vector<1x32x1xf32>
    %13 = arith.mulf %5, %12 : vector<1x32x1xf32>
    %14 = arith.mulf %11, %11 : vector<1x32x1xf32>
    %15 = arith.subf %13, %14 : vector<1x32x1xf32>
    %cst_17 = arith.constant 0.000000e+00 : f32
    %16 = vector.broadcast %cst_17 : f32 to vector<1x32x1xf32>
    %17 = arith.maximumf %15, %16 : vector<1x32x1xf32>
    %18 = math.sqrt %17 : vector<1x32x1xf32>
    %19 = arith.addf %18, %11 : vector<1x32x1xf32>
    %20 = vector.broadcast %19 : vector<1x32x1xf32> to vector<1x32x2xf32>
    %21 = arith.mulf %20, %6 : vector<1x32x2xf32>
    %cst_18 = arith.constant dense<0.000000e+00> : vector<1x2xf32>
    %22 = vector.multi_reduction <add>, %21, %cst_18 [1] : vector<1x32x2xf32> to vector<1x2xf32>
    %23 = vector.shape_cast %22 : vector<1x2xf32> to vector<1x1x2xf32>
    %24 = arith.addf %23, %7 : vector<1x1x2xf32>
    %cst_19 = arith.constant 0.000000e+00 : f32
    %25 = vector.broadcast %cst_19 : f32 to vector<1x1x2xf32>
    %26 = arith.maximumf %24, %25 : vector<1x1x2xf32>
    %27 = vector.broadcast %26 : vector<1x1x2xf32> to vector<1x32x2xf32>
    %28 = arith.mulf %27, %8 : vector<1x32x2xf32>
    %cst_20 = arith.constant dense<0.000000e+00> : vector<1x32xf32>
    %29 = vector.multi_reduction <add>, %28, %cst_20 [2] : vector<1x32x2xf32> to vector<1x32xf32>
    %30 = vector.shape_cast %29 : vector<1x32xf32> to vector<1x32x1xf32>
    %31 = arith.addf %30, %9 : vector<1x32x1xf32>
    %cst_21 = arith.constant 0.000000e+00 : f32
    %32 = vector.broadcast %cst_21 : f32 to vector<1x32x1xf32>
    %33 = arith.subf %32, %31 : vector<1x32x1xf32>
    %34 = math.exp %33 : vector<1x32x1xf32>
    %cst_22 = arith.constant 1.000000e+00 : f32
    %35 = vector.broadcast %cst_22 : f32 to vector<1x32x1xf32>
    %36 = arith.addf %35, %34 : vector<1x32x1xf32>
    %cst_23 = arith.constant 1.000000e+00 : f32
    %37 = vector.broadcast %cst_23 : f32 to vector<1x32x1xf32>
    %38 = arith.divf %37, %36 : vector<1x32x1xf32>
    %39 = vector.broadcast %38 : vector<1x32x1xf32> to vector<1x32x256xf32>
    %40 = arith.mulf %0, %39 : vector<1x32x256xf32>
    %c0_24 = arith.constant 0 : index
    %c0_25 = arith.constant 0 : index
    %c0_26 = arith.constant 0 : index
    %41 = vector.load %arg6[%c0_24, %c0_25, %c0_26] : memref<1x32x256xf32, #tpu.memory_space<vmem>>, vector<1x32x256xf32>
    tpu.vector_store %arg6[%c0_24, %c0_25, %c0_26], %40 {strides = array<i32>} : memref<1x32x256xf32, #tpu.memory_space<vmem>>, vector<1x32x256xf32>,
    return
  }
  func.func @transform_0(%arg0: i32) -> (i32, i32, i32) {
    %c0_i32 = arith.constant 0 : i32
    %c0_i32_0 = arith.constant 0 : i32
    %c0_i32_1 = arith.constant 0 : i32
    return %arg0, %c0_i32, %c0_i32_0 : i32, i32, i32
  }
  func.func @transform_1(%arg0: i32) -> (i32, i32, i32) {
    %c0_i32 = arith.constant 0 : i32
    %c0_i32_0 = arith.constant 0 : i32
    %c0_i32_1 = arith.constant 0 : i32
    %c0_i32_2 = arith.constant 0 : i32
    return %c0_i32, %c0_i32_0, %c0_i32_1 : i32, i32, i32
  }
  func.func @transform_2(%arg0: i32) -> (i32, i32, i32) {
    %c0_i32 = arith.constant 0 : i32
    %c0_i32_0 = arith.constant 0 : i32
    %c0_i32_1 = arith.constant 0 : i32
    %c0_i32_2 = arith.constant 0 : i32
    return %c0_i32, %c0_i32_0, %c0_i32_1 : i32, i32, i32
  }
  func.func @transform_3(%arg0: i32) -> (i32, i32, i32) {
    %c0_i32 = arith.constant 0 : i32
    %c0_i32_0 = arith.constant 0 : i32
    %c0_i32_1 = arith.constant 0 : i32
    %c0_i32_2 = arith.constant 0 : i32
    return %c0_i32, %c0_i32_0, %c0_i32_1 : i32, i32, i32
  }
  func.func @transform_4(%arg0: i32) -> (i32, i32, i32) {
    %c0_i32 = arith.constant 0 : i32
    %c0_i32_0 = arith.constant 0 : i32
    %c0_i32_1 = arith.constant 0 : i32
    %c0_i32_2 = arith.constant 0 : i32
    return %c0_i32, %c0_i32_0, %c0_i32_1 : i32, i32, i32
  }
  func.func @transform_5(%arg0: i32) -> (i32, i32, i32) {
    %c0_i32 = arith.constant 0 : i32
    %c0_i32_0 = arith.constant 0 : i32
    %c0_i32_1 = arith.constant 0 : i32
    return %arg0, %c0_i32, %c0_i32_0 : i32, i32, i32
  }
}

</mosaic_0001>

<llo_original>
// kernel: tpu_custom_call.1
$region0: #{tpu_custom_call.1}
  #allocation0 [shape = 'u32[]', space=smem, size = 0x4, offset = 0x4, fixed_abs, tag = 'smem constant byte address 0x4 - core index']
  #allocation1 [shape = 'u32[144,128]{1,0:T(1,128)}', space=vmem, size = 0x12000, scoped, tag = 'internal scratch']
  %s0 = inlined_call_operand.hbm [shape: f32[2,32,256], index: 0, kind: input, shape index: {}]
  %s1 = inlined_call_operand.vmem [shape: f32[1,32,2], index: 1, kind: input, shape index: {}]
  %s2 = inlined_call_operand.vmem [shape: f32[1,1,2], index: 2, kind: input, shape index: {}]
  %s3 = inlined_call_operand.vmem [shape: f32[1,32,2], index: 3, kind: input, shape index: {}]
  %s4 = inlined_call_operand.vmem [shape: f32[1,32,1], index: 4, kind: input, shape index: {}]
  %s5 = inlined_call_operand.hbm [shape: f32[2,32,256], index: 5, kind: output, shape index: {}]
  %s6 = sld [smem:[#allocation0]]
  $region57: #{tpu_custom_call.1} parent=0
    _
  %s8 = ssub.s32 1, %s6
  %s9 = scalar_select 0, %s8, %s6
  $region1: #{tpu_custom_call.1} parent=0
    #allocation2 [shape = 'u8[65536]{0}', space=vmem, size = 0x10000, scoped, tag = 'input window, operand 0']
    #allocation3 [shape = 's32[2]{0}', space=sflag, size = 0x8, scoped, tag = 'scoped memory for tpu_custom_call.1']
    #allocation4 [shape = 's32[2]{0}', space=sflag, size = 0x8, scoped, tag = 'scoped memory for tpu_custom_call.1']
    #allocation5 [shape = 'u8[65536]{0}', space=vmem, size = 0x10000, scoped, tag = 'output window, operand 0']
    %10 = vsyncpa [#allocation3], 0
    %s11 = scalar_lea.sflag [#allocation3], 1
    %12 = vsyncpa %s11, 0
    %13 = vsyncpa [#allocation4], 0
    %s14 = scalar_lea.sflag [#allocation4], 1
    %15 = vsyncpa %s14, 0
    loop: start=0, step=1, limit=4
    $region2: #{tpu_custom_call.1} parent=1 // loop_pre_header
      _
    $region3: #{tpu_custom_call.1} parent=1 // loop_header
      %s17 = sphi 0, %s21
      %p18 = scmp.ge.s32.totalorder %s17, 4
      %s27 = sphi 0, %s29
      %s30 = sphi 0, %s27
      %s31 = sphi 0, %s30
      %s47 = sphi 0, %s31
      %s51 = sphi 0, %s51
      %s53 = sphi 0, %s51
      %s54 = sphi 0, %s53
      %s68 = sphi 0, %s54
      %s72 = sphi 0, %s72
      %s74 = sphi 0, %s72
      %s75 = sphi 0, %s74
      %s89 = sphi 0, %s75
      %s93 = sphi 0, %s93
      %s95 = sphi 0, %s93
      %s96 = sphi 0, %s95
      %s110 = sphi 0, %s96
      %s114 = sphi 0, %s114
      %s116 = sphi 0, %s114
      %s117 = sphi 0, %s116
      %s131 = sphi 0, %s117
      %s137 = sphi 0, %s139
      %s140 = sphi 0, %s137
      %s141 = sphi 0, %s140
      %s157 = sphi 0, %s141
    $region4: #{tpu_custom_call.1} parent=1 // loop_header_branch
      %20 = sbr.rel (%p18) target = $region8
    $region5: #{tpu_custom_call.1} parent=1 // loop_body
      %s22 = ssub.s32 %s17, 1
      %s23 = ssub.s32 %s17, 2
      %s24 = sadd.s32 %s17, 1
      %s25 = ssub.s32 %s17, %s24
      %p26 = scmp.eq.s32.totalorder %s25, 0
      %s28 = sadd.s32 %s27, 1
      %s29 = scalar_select %p26, %s27, %s28
      %p32 = pneg %p26
      %p33 = scmp.eq.s32.totalorder %s17, 1
      %p34 = por %p32, %p33
      %p35 = scmp.ne.s32.totalorder %s27, %s30
      %p36 = scmp.eq.s32.totalorder %s17, 0
      %p37 = por %p35, %p36
      %p38 = scmp.ne.s32.totalorder %s27, %s30
      %p39 = scmp.eq.s32.totalorder %s22, 1
      %p40 = por %p38, %p39
      %p41 = scmp.ne.s32.totalorder %s30, %s31
      %p42 = scmp.eq.s32.totalorder %s22, 0
      %p43 = por %p41, %p42
      %p44 = scmp.ne.s32.totalorder %s30, %s31
      %p45 = scmp.eq.s32.totalorder %s23, 1
      %p46 = por %p44, %p45
      %p48 = scmp.ne.s32.totalorder %s31, %s47
      %p49 = scmp.eq.s32.totalorder %s23, 0
      %p50 = por %p48, %p49
      %s52 = sadd.s32 %s51, 1
      %p55 = scmp.eq.s32.totalorder %s17, 1
      %p56 = scmp.ne.s32.totalorder %s51, %s53
      %p57 = scmp.eq.s32.totalorder %s17, 0
      %p58 = por %p56, %p57
      %p59 = scmp.ne.s32.totalorder %s51, %s53
      %p60 = scmp.eq.s32.totalorder %s22, 1
      %p61 = por %p59, %p60
      %p62 = scmp.ne.s32.totalorder %s53, %s54
      %p63 = scmp.eq.s32.totalorder %s22, 0
      %p64 = por %p62, %p63
      %p65 = scmp.ne.s32.totalorder %s53, %s54
      %p66 = scmp.eq.s32.totalorder %s23, 1
      %p67 = por %p65, %p66
      %p69 = scmp.ne.s32.totalorder %s54, %s68
      %p70 = scmp.eq.s32.totalorder %s23, 0
      %p71 = por %p69, %p70
      %s73 = sadd.s32 %s72, 1
      %p76 = scmp.eq.s32.totalorder %s17, 1
      %p77 = scmp.ne.s32.totalorder %s72, %s74
      %p78 = scmp.eq.s32.totalorder %s17, 0
      %p79 = por %p77, %p78
      %p80 = scmp.ne.s32.totalorder %s72, %s74
      %p81 = scmp.eq.s32.totalorder %s22, 1
      %p82 = por %p80, %p81
      %p83 = scmp.ne.s32.totalorder %s74, %s75
      %p84 = scmp.eq.s32.totalorder %s22, 0
      %p85 = por %p83, %p84
      %p86 = scmp.ne.s32.totalorder %s74, %s75
      %p87 = scmp.eq.s32.totalorder %s23, 1
      %p88 = por %p86, %p87
      %p90 = scmp.ne.s32.totalorder %s75, %s89
      %p91 = scmp.eq.s32.totalorder %s23, 0
      %p92 = por %p90, %p91
      %s94 = sadd.s32 %s93, 1
      %p97 = scmp.eq.s32.totalorder %s17, 1
      %p98 = scmp.ne.s32.totalorder %s93, %s95
      %p99 = scmp.eq.s32.totalorder %s17, 0
      %p100 = por %p98, %p99
      %p101 = scmp.ne.s32.totalorder %s93, %s95
      %p102 = scmp.eq.s32.totalorder %s22, 1
      %p103 = por %p101, %p102
      %p104 = scmp.ne.s32.totalorder %s95, %s96
      %p105 = scmp.eq.s32.totalorder %s22, 0
      %p106 = por %p104, %p105
      %p107 = scmp.ne.s32.totalorder %s95, %s96
      %p108 = scmp.eq.s32.totalorder %s23, 1
      %p109 = por %p107, %p108
      %p111 = scmp.ne.s32.totalorder %s96, %s110
      %p112 = scmp.eq.s32.totalorder %s23, 0
      %p113 = por %p111, %p112
      %s115 = sadd.s32 %s114, 1
      %p118 = scmp.eq.s32.totalorder %s17, 1
      %p119 = scmp.ne.s32.totalorder %s114, %s116
      %p120 = scmp.eq.s32.totalorder %s17, 0
      %p121 = por %p119, %p120
      %p122 = scmp.ne.s32.totalorder %s114, %s116
      %p123 = scmp.eq.s32.totalorder %s22, 1
      %p124 = por %p122, %p123
      %p125 = scmp.ne.s32.totalorder %s116, %s117
      %p126 = scmp.eq.s32.totalorder %s22, 0
      %p127 = por %p125, %p126
      %p128 = scmp.ne.s32.totalorder %s116, %s117
      %p129 = scmp.eq.s32.totalorder %s23, 1
      %p130 = por %p128, %p129
      %p132 = scmp.ne.s32.totalorder %s117, %s131
      %p133 = scmp.eq.s32.totalorder %s23, 0
      %p134 = por %p132, %p133
      %s135 = ssub.s32 %s17, %s24
      %p136 = scmp.eq.s32.totalorder %s135, 0
      %s138 = sadd.s32 %s137, 1
      %s139 = scalar_select %p136, %s137, %s138
      %p142 = pneg %p136
      %p143 = scmp.eq.s32.totalorder %s17, 1
      %p144 = por %p142, %p143
      %p145 = scmp.ne.s32.totalorder %s137, %s140
      %p146 = scmp.eq.s32.totalorder %s17, 0
      %p147 = por %p145, %p146
      %p148 = scmp.ne.s32.totalorder %s137, %s140
      %p149 = scmp.eq.s32.totalorder %s22, 1
      %p150 = por %p148, %p149
      %p151 = scmp.ne.s32.totalorder %s140, %s141
      %p152 = scmp.eq.s32.totalorder %s22, 0
      %p153 = por %p151, %p152
      %p154 = scmp.ne.s32.totalorder %s140, %s141
      %p155 = scmp.eq.s32.totalorder %s23, 1
      %p156 = por %p154, %p155
      %p158 = scmp.ne.s32.totalorder %s141, %s157
      %p159 = scmp.eq.s32.totalorder %s23, 0
      %p160 = por %p158, %p159
      %p161 = scmp.le.s32.totalorder 1, %s17
      %p162 = scmp.lt.s32.totalorder %s17, 3
      %p163 = pnand %p161, %p162
      %p164 = pneg %p163
      // Predicated region
      $region9: #{tpu_custom_call.1} parent=5 // pred_check
        _
      $region10: #{tpu_custom_call.1} parent=5 // pred_check_branch
        %166 = sbr.rel (%p163) target = $region12
      $region11: #{tpu_custom_call.1} parent=5 // pred_region
        %s167 = ssub.s32 %s17, 1
        // Predicated region
        $region13: #{tpu_custom_call.1} parent=11 // pred_check
          %p168 = pneg %p64
        $region14: #{tpu_custom_call.1} parent=11 // pred_check_branch
          %170 = sbr.rel (%p168) target = $region16
        $region15: #{tpu_custom_call.1} parent=11 // pred_region
          _
        $region16: #{tpu_custom_call.1} parent=11 // pred_fallthru
          _
        // Predicated region
        $region17: #{tpu_custom_call.1} parent=11 // pred_check
          %p171 = pneg %p85
        $region18: #{tpu_custom_call.1} parent=11 // pred_check_branch
          %173 = sbr.rel (%p171) target = $region20
        $region19: #{tpu_custom_call.1} parent=11 // pred_region
          _
        $region20: #{tpu_custom_call.1} parent=11 // pred_fallthru
          _
        // Predicated region
        $region21: #{tpu_custom_call.1} parent=11 // pred_check
          %p174 = pneg %p106
        $region22: #{tpu_custom_call.1} parent=11 // pred_check_branch
          %176 = sbr.rel (%p174) target = $region24
        $region23: #{tpu_custom_call.1} parent=11 // pred_region
          _
        $region24: #{tpu_custom_call.1} parent=11 // pred_fallthru
          _
        // Predicated region
        $region25: #{tpu_custom_call.1} parent=11 // pred_check
          %p177 = pneg %p127
        $region26: #{tpu_custom_call.1} parent=11 // pred_check_branch
          %179 = sbr.rel (%p177) target = $region28
        $region27: #{tpu_custom_call.1} parent=11 // pred_region
          _
        $region28: #{tpu_custom_call.1} parent=11 // pred_fallthru
          _
      $region12: #{tpu_custom_call.1} parent=5 // pred_fallthru
        _
      %p180 = scmp.lt.s32.totalorder %s17, 2
      // Predicated region
      $region29: #{tpu_custom_call.1} parent=5 // pred_check
        %p181 = pneg %p180
      $region30: #{tpu_custom_call.1} parent=5 // pred_check_branch
        %183 = sbr.rel (%p181) target = $region32
      $region31: #{tpu_custom_call.1} parent=5 // pred_region
        // Predicated region
        $region33: #{tpu_custom_call.1} parent=31 // pred_check
          %p184 = pneg %p37
        $region34: #{tpu_custom_call.1} parent=31 // pred_check_branch
          %186 = sbr.rel (%p184) target = $region36
        $region35: #{tpu_custom_call.1} parent=31 // pred_region
          %s187 = sand.u32 %s27, 1
          %s188 = scalar_lea.sflag [#allocation3], %s187
          %s189 = sand.u32 %s27, 1
          %s190 = smul.addr %s189, 64
          %s191 = scalar_lea.vmem [#allocation2], %s190
          %s193 = ssub.s32 1024, 1024
          %194 = vsyncadd %s188, %s193
          %s195 = smul.addr %s17, 8
          %s196 = smul.addr %s195, 128
          %s197 = scalar_lea.hbm %s0, %s196
          %s198 = sshll.u32 %s191, 4
          %s199 = int_to_ptr.vmem [resolvable:$true] %s198
          %204 = dma.hbm_to_vmem [thread:$0]  %s197, 1024, %s199, %s188, 256, 256, 16
        $region36: #{tpu_custom_call.1} parent=31 // pred_fallthru
          _
      $region32: #{tpu_custom_call.1} parent=5 // pred_fallthru
        _
      %p205 = scmp.le.s32.totalorder 1, %s17
      %p206 = scmp.lt.s32.totalorder %s17, 3
      %p207 = pnand %p205, %p206
      %p208 = pneg %p207
      // Predicated region
      $region37: #{tpu_custom_call.1} parent=5 // pred_check
        _
      $region38: #{tpu_custom_call.1} parent=5 // pred_check_branch
        %210 = sbr.rel (%p207) target = $region40
      $region39: #{tpu_custom_call.1} parent=5 // pred_region
        %s211 = ssub.s32 %s17, 1
        %s212 = sand.u32 %s30, 1
        %s213 = scalar_lea.sflag [#allocation3], %s212
        %s214 = sand.u32 %s30, 1
        %s215 = smul.addr %s214, 64
        %s216 = scalar_lea.vmem [#allocation2], %s215
        // Predicated region
        $region41: #{tpu_custom_call.1} parent=39 // pred_check
          %p217 = pneg %p43
        $region42: #{tpu_custom_call.1} parent=39 // pred_check_branch
          %219 = sbr.rel (%p217) target = $region44
        $region43: #{tpu_custom_call.1} parent=39 // pred_region
          %220 = dma.done %s213, 1024
        $region44: #{tpu_custom_call.1} parent=39 // pred_fallthru
          _
        %s221 = sand.u32 %s30, 1
        %s222 = scalar_lea.sflag [#allocation3], %s221
        %s223 = sand.u32 %s30, 1
        %s224 = smul.addr %s223, 64
        %s225 = scalar_lea.vmem [#allocation2], %s224
        %p226 = pneg %p43
        %p227 = pneg %p40
        %p228 = pneg %p64
        %p229 = pneg %p61
        %p230 = pneg %p85
        %p231 = pneg %p82
        %p232 = pneg %p106
        %p233 = pneg %p103
        %p234 = pneg %p127
        %p235 = pneg %p124
        %p236 = pneg %p153
        %p237 = pneg %p150
        %s238 = sand.u32 %s140, 1
        %s239 = scalar_lea.sflag [#allocation4], %s238
        %s240 = sand.u32 %s140, 1
        %s241 = smul.addr %s240, 64
        %s242 = scalar_lea.vmem [#allocation5], %s241
        %v243 = vld [vmem:[%s216] sm:$0xff]
        %v244 = vld [vmem:[%s216 + $0x8] sm:$0xff]
        %v245 = vld [vmem:[%s216 + $0x10] sm:$0xff]
        %v246 = vld [vmem:[%s216 + $0x18] sm:$0xff]
        %v247 = vld [vmem:[%s216 + $0x20] sm:$0xff]
        %v248 = vld [vmem:[%s216 + $0x28] sm:$0xff]
        %v249 = vld [vmem:[%s216 + $0x30] sm:$0xff]
        %v250 = vld [vmem:[%s216 + $0x38] sm:$0xff]
        %v251 = vadd.f32 %v243, %v244
        %252 = vadd.xlane.f32.xlu0 %v251
        %v253 = vpop.xlane.xlu0 %252
        %v254 = vadd.f32 %v245, %v246
        %255 = vadd.xlane.f32.xlu0 %v254
        %v256 = vpop.xlane.xlu0 %255
        %v257 = vadd.f32 %v247, %v248
        %258 = vadd.xlane.f32.xlu0 %v257
        %v259 = vpop.xlane.xlu0 %258
        %v260 = vadd.f32 %v249, %v250
        %261 = vadd.xlane.f32.xlu0 %v260
        %v262 = vpop.xlane.xlu0 %261
        %v263 = vmul.f32 %v243, %v243
        %v264 = vmul.f32 %v244, %v244
        %v265 = vmul.f32 %v245, %v245
        %v266 = vmul.f32 %v246, %v246
        %v267 = vmul.f32 %v247, %v247
        %v268 = vmul.f32 %v248, %v248
        %v269 = vmul.f32 %v249, %v249
        %v270 = vmul.f32 %v250, %v250
        %v271 = vadd.f32 %v263, %v264
        %272 = vadd.xlane.f32.xlu0 %v271
        %v273 = vpop.xlane.xlu0 %272
        %v274 = vadd.f32 %v265, %v266
        %275 = vadd.xlane.f32.xlu0 %v274
        %v276 = vpop.xlane.xlu0 %275
        %v277 = vadd.f32 %v267, %v268
        %278 = vadd.xlane.f32.xlu0 %v277
        %v279 = vpop.xlane.xlu0 %278
        %v280 = vadd.f32 %v269, %v270
        %281 = vadd.xlane.f32.xlu0 %v280
        %v282 = vpop.xlane.xlu0 %281
        %v283 = vld [vmem:[%s1] sm:$0xff]
        %v284 = vld [vmem:[%s1 + $0x8] sm:$0xff]
        %v285 = vld [vmem:[%s1 + $0x10] sm:$0xff]
        %v286 = vld [vmem:[%s1 + $0x18] sm:$0xff]
        %v287 = vld [vmem:[%s2] sm:$0x1]
        %v288 = vld [vmem:[%s3] sm:$0xff]
        %v289 = vld [vmem:[%s3 + $0x8] sm:$0xff]
        %v290 = vld [vmem:[%s3 + $0x10] sm:$0xff]
        %v291 = vld [vmem:[%s3 + $0x18] sm:$0xff]
        %v292 = vld [vmem:[%s4] sm:$0xff]
        %v293 = vld [vmem:[%s4 + $0x8] sm:$0xff]
        %v294 = vld [vmem:[%s4 + $0x10] sm:$0xff]
        %v295 = vld [vmem:[%s4 + $0x18] sm:$0xff]
        %v296 = vmul.f32 %v253, 0.00390625
        %v297 = vmul.f32 %v256, 0.00390625
        %v298 = vmul.f32 %v259, 0.00390625
        %v299 = vmul.f32 %v262, 0.00390625
        %v300 = vmul.f32 %v273, 0.00390625
        %v301 = vmul.f32 %v276, 0.00390625
        %v302 = vmul.f32 %v279, 0.00390625
        %v303 = vmul.f32 %v282, 0.00390625
        %v304 = vmul.f32 %v296, %v296
        %v305 = vmul.f32 %v297, %v297
        %v306 = vmul.f32 %v298, %v298
        %v307 = vmul.f32 %v299, %v299
        %v308 = vsub.f32 %v300, %v304
        %v309 = vsub.f32 %v301, %v305
        %v310 = vsub.f32 %v302, %v306
        %v311 = vsub.f32 %v303, %v307
        %v312 = vmax.f32 %v308, 0.0
        %v313 = vmax.f32 %v309, 0.0
        %v314 = vmax.f32 %v310, 0.0
        %v315 = vmax.f32 %v311, 0.0
        %v316 = vrsqrt.pop %v312
        %v317 = vmul.f32 %v312, %v316
        %vm318 = vcmp.eq.f32.partialorder %v312, inf
        %v319 = vsel %vm318, %v312, %v317
        %vm320 = vcmp.eq.f32.partialorder %v312, 0.0
        %v321 = vand.u32 %v312, 2147483648
        %v322 = vsel %vm320, %v321, %v319
        %v323 = vrsqrt.pop %v313
        %v324 = vmul.f32 %v313, %v323
        %vm325 = vcmp.eq.f32.partialorder %v313, inf
        %v326 = vsel %vm325, %v313, %v324
        %vm327 = vcmp.eq.f32.partialorder %v313, 0.0
        %v328 = vand.u32 %v313, 2147483648
        %v329 = vsel %vm327, %v328, %v326
        %v330 = vrsqrt.pop %v314
        %v331 = vmul.f32 %v314, %v330
        %vm332 = vcmp.eq.f32.partialorder %v314, inf
        %v333 = vsel %vm332, %v314, %v331
        %vm334 = vcmp.eq.f32.partialorder %v314, 0.0
        %v335 = vand.u32 %v314, 2147483648
        %v336 = vsel %vm334, %v335, %v333
        %v337 = vrsqrt.pop %v315
        %v338 = vmul.f32 %v315, %v337
        %vm339 = vcmp.eq.f32.partialorder %v315, inf
        %v340 = vsel %vm339, %v315, %v338
        %vm341 = vcmp.eq.f32.partialorder %v315, 0.0
        %v342 = vand.u32 %v315, 2147483648
        %v343 = vsel %vm341, %v342, %v340
        %v344 = vadd.f32 %v322, %v296
        %v345 = vadd.f32 %v329, %v297
        %v346 = vadd.f32 %v336, %v298
        %v347 = vadd.f32 %v343, %v299
        %v348 = vmul.f32 %v344, %v283
        %v349 = vmul.f32 %v345, %v284
        %v350 = vmul.f32 %v346, %v285
        %v351 = vmul.f32 %v347, %v286
        %vm352 = vcmask 15360
        %v353 = vsel %vm352, %v348, 0.0
        %v354 = vsel %vm352, %v349, 0.0
        %v355 = vadd.f32 %v353, %v354
        %v356 = vsel %vm352, %v350, 0.0
        %v357 = vadd.f32 %v355, %v356
        %v358 = vsel %vm352, %v351, 0.0
        %v359 = vadd.f32 %v357, %v358
        %v360 = vrot.slane %v359, 4
        %v361 = vadd.f32 %v359, %v360
        %v362 = vrot.slane %v361, 2
        %v363 = vadd.f32 %v361, %v362
        %v364 = vrot.slane %v363, 1
        %v365 = vadd.f32 %v363, %v364
        %v366 = vadd.f32 %v365, %v287
        %v367 = vmax.f32 %v366, 0.0
        %v368 = vlaneseq
        %v369 = vshrl.u32 %v368, 7
        %v370 = vsub.s32 0, %v369
        %v371 = vrot.slane %v367, %v370
        %v372 = vmul.f32 %v371, %v288
        %v373 = vmul.f32 %v371, %v289
        %v374 = vmul.f32 %v371, %v290
        %v375 = vmul.f32 %v371, %v291
        %v376 = vsel %vm352, %v372, 0.0
        %377 = vadd.xlane.f32.xlu0 %v376
        %v378 = vpop.xlane.xlu0 %377
        %v379 = vsel %vm352, %v373, 0.0
        %380 = vadd.xlane.f32.xlu0 %v379
        %v381 = vpop.xlane.xlu0 %380
        %v382 = vsel %vm352, %v374, 0.0
        %383 = vadd.xlane.f32.xlu0 %v382
        %v384 = vpop.xlane.xlu0 %383
        %v385 = vsel %vm352, %v375, 0.0
        %386 = vadd.xlane.f32.xlu0 %v385
        %v387 = vpop.xlane.xlu0 %386
        %v388 = vadd.f32 %v378, %v292
        %v389 = vadd.f32 %v381, %v293
        %v390 = vadd.f32 %v384, %v294
        %v391 = vadd.f32 %v387, %v295
        %v392 = vsub.f32 0.0, %v388
        %v393 = vsub.f32 0.0, %v389
        %v394 = vsub.f32 0.0, %v390
        %v395 = vsub.f32 0.0, %v391
        %v396 = vmul.f32 %v392, 1.442695
        %v397 = vpow.pop %v396
        %v398 = vmul.f32 %v393, 1.442695
        %v399 = vpow.pop %v398
        %v400 = vmul.f32 %v394, 1.442695
        %v401 = vpow.pop %v400
        %v402 = vmul.f32 %v395, 1.442695
        %v403 = vpow.pop %v402
        %v404 = vadd.f32 %v397, 1.0
        %v405 = vadd.f32 %v399, 1.0
        %v406 = vadd.f32 %v401, 1.0
        %v407 = vadd.f32 %v403, 1.0
        %v408 = vrcp.pop %v404
        %v409 = vmul.f32 1.0, %v408
        %v410 = vrcp.pop %v405
        %v411 = vmul.f32 1.0, %v410
        %v412 = vrcp.pop %v406
        %v413 = vmul.f32 1.0, %v412
        %v414 = vrcp.pop %v407
        %v415 = vmul.f32 1.0, %v414
        %417 = vset.pattern.permute.xlu0 0
        %418 = vperm.xlu0 %417, %v409
        %v419 = vpop.permute.xlu0 %418
        %422 = vset.pattern.permute.xlu0 0
        %423 = vperm.xlu0 %422, %v411
        %v424 = vpop.permute.xlu0 %423
        %427 = vset.pattern.permute.xlu0 0
        %428 = vperm.xlu0 %427, %v413
        %v429 = vpop.permute.xlu0 %428
        %432 = vset.pattern.permute.xlu0 0
        %433 = vperm.xlu0 %432, %v415
        %v434 = vpop.permute.xlu0 %433
        %v436 = vmul.f32 %v243, %v419
        %v437 = vmul.f32 %v244, %v419
        %v438 = vmul.f32 %v245, %v424
        %v439 = vmul.f32 %v246, %v424
        %v440 = vmul.f32 %v247, %v429
        %v441 = vmul.f32 %v248, %v429
        %v442 = vmul.f32 %v249, %v434
        %v443 = vmul.f32 %v250, %v434
        %444 = vst [vmem:[%s242] sm:$0xff] %v436
        %445 = vst [vmem:[%s242 + $0x8] sm:$0xff] %v437
        %446 = vst [vmem:[%s242 + $0x10] sm:$0xff] %v438
        %447 = vst [vmem:[%s242 + $0x18] sm:$0xff] %v439
        %448 = vst [vmem:[%s242 + $0x20] sm:$0xff] %v440
        %449 = vst [vmem:[%s242 + $0x28] sm:$0xff] %v441
        %450 = vst [vmem:[%s242 + $0x30] sm:$0xff] %v442
        %451 = vst [vmem:[%s242 + $0x38] sm:$0xff] %v443
        %s452 = sand.u32 %s140, 1
        %s453 = scalar_lea.sflag [#allocation4], %s452
        %s454 = sand.u32 %s140, 1
        %s455 = smul.addr %s454, 64
        %s456 = scalar_lea.vmem [#allocation5], %s455
        // Predicated region
        $region45: #{tpu_custom_call.1} parent=39 // pred_check
          %p457 = pneg %p150
        $region46: #{tpu_custom_call.1} parent=39 // pred_check_branch
          %459 = sbr.rel (%p457) target = $region48
        $region47: #{tpu_custom_call.1} parent=39 // pred_region
          %s461 = ssub.s32 1024, 1024
          %462 = vsyncadd %s453, %s461
          %s463 = smul.addr %s22, 8
          %s464 = smul.addr %s463, 128
          %s465 = scalar_lea.hbm %s5, %s464
          %s466 = sshll.u32 %s456, 4
          %s467 = int_to_ptr.vmem [resolvable:$true] %s466
          %472 = dma.vmem_to_hbm [thread:$0]  %s467, 1024, %s465, %s453, 256, 256, 16
        $region48: #{tpu_custom_call.1} parent=39 // pred_fallthru
          _
      $region40: #{tpu_custom_call.1} parent=5 // pred_fallthru
        _
      %p473 = scmp.le.s32.totalorder 2, %s17
      // Predicated region
      $region49: #{tpu_custom_call.1} parent=5 // pred_check
        %p474 = pneg %p473
      $region50: #{tpu_custom_call.1} parent=5 // pred_check_branch
        %476 = sbr.rel (%p474) target = $region52
      $region51: #{tpu_custom_call.1} parent=5 // pred_region
        %s477 = ssub.s32 %s17, 2
        // Predicated region
        $region53: #{tpu_custom_call.1} parent=51 // pred_check
          %p478 = pneg %p156
        $region54: #{tpu_custom_call.1} parent=51 // pred_check_branch
          %480 = sbr.rel (%p478) target = $region56
        $region55: #{tpu_custom_call.1} parent=51 // pred_region
          %s481 = sand.u32 %s141, 1
          %s482 = scalar_lea.sflag [#allocation4], %s481
          %s483 = sand.u32 %s141, 1
          %s484 = smul.addr %s483, 64
          %s485 = scalar_lea.vmem [#allocation5], %s484
          %486 = dma.done %s482, 1024
        $region56: #{tpu_custom_call.1} parent=51 // pred_fallthru
          _
      $region52: #{tpu_custom_call.1} parent=5 // pred_fallthru
        _
    $region6: #{tpu_custom_call.1} parent=1 // loop_footer
      %s21 = sadd.s32 1, %s17
    $region7: #{tpu_custom_call.1} parent=1 // loop_footer_branch
      %16 = sbr.rel target = $region3
    $region8: #{tpu_custom_call.1} parent=1 // loop_exit
      _
    %487 = vsyncpa [#allocation3], 1
    %s488 = scalar_lea.sflag [#allocation3], 1
    %489 = vsyncpa %s488, 1
    %490 = vsyncpa [#allocation4], 1
    %s491 = scalar_lea.sflag [#allocation4], 1
    %492 = vsyncpa %s491, 1

</llo_original>
